<compile_context>
chip_gen: v7x
topology: tpu7x:2x2x1
jax: 0.10.0
libtpu: 0.0.40
codegen_flags: <defaults>
</compile_context>

<pallas_src>
import functools

import jax
import jax.numpy as jnp
from jax.experimental import pallas as pl
from jax.experimental.pallas import tpu as pltpu

_LANE = 128
_SUBLANE = 8


def _num_tensorcores():
    # 2 TensorCores per chip on v7x; 1 on v5e/v6e.  Best-effort device query;
    # defaulting to 1 is always safe (the core axis just becomes size 1).
    try:
        kind = jax.devices()[0].device_kind.lower()
    except Exception:
        return 1
    return 2 if "v7" in kind else 1


def _rmse_partial_kernel(x_ref, y_ref, out_ref, acc_ref, *,
                         steps, total_blocks, block_rows, valid_last_rows):
    c = pl.program_id(0)          # core-split axis
    i = pl.program_id(1)          # sequential reduction steps for this core
    b = c * steps + i             # global block index handled by this step

    @pl.when(i == 0)
    def _():
        acc_ref[...] = jnp.zeros_like(acc_ref)

    # Scalar guard replaces the old per-element mask: idle trailing steps
    # (whose index_map was clamped to a duplicate block) contribute nothing.
    @pl.when(b < total_blocks)
    def _():
        # Inputs travel over HBM in their native dtype; upcast per tile.
        d = x_ref[...].astype(jnp.float32) - y_ref[...].astype(jnp.float32)
        sq = d * d

        def fold(v):
            # (block_rows, 128) -> (8, 128): pure elementwise VPU adds, no
            # cross-lane/sublane traffic (the (8, 128) trailing dims map 1:1
            # onto a vreg, so the reshape is layout-free).
            return jnp.sum(
                v.reshape(block_rows // _SUBLANE, _SUBLANE, _LANE), axis=0)

        if valid_last_rows == block_rows:
            # Row count is block-aligned: no masking anywhere.
            acc_ref[...] += fold(sq)
        else:
            # Only the final (partial) block contains out-of-bounds rows with
            # unspecified data; mask rows there.  All other steps take the
            # unmasked fast path at runtime via pl.when.
            @pl.when(b == total_blocks - 1)
            def _():
                row_ids = jax.lax.broadcasted_iota(
                    jnp.int32, (block_rows, _LANE), 0)
                acc_ref[...] += fold(
                    jnp.where(row_ids < valid_last_rows, sq, 0.0))

            @pl.when(b != total_blocks - 1)
            def _():
                acc_ref[...] += fold(sq)

    # One cross-lane/sublane reduce per core, only on its last step.
    @pl.when(i == pl.num_programs(1) - 1)
    def _():
        out_ref[0, 0] = jnp.sum(acc_ref[...])


def rmse_loss(x, y, *, block_rows=None):
    """RMSE(x, y) = sqrt(mean((x - y)^2)). x, y: same shape, any float dtype."""
    assert x.shape == y.shape, "x and y must have the same shape"
    n = x.size

    xf = x.reshape(-1)
    yf = y.reshape(-1)

    itemsize = min(jnp.dtype(x.dtype).itemsize, jnp.dtype(y.dtype).itemsize)
    itemsize = min(itemsize, 4)
    pack = _SUBLANE * (4 // itemsize)   # sublane pack: 8 f32, 16 bf16, 32 8-bit

    rows = n // _LANE
    if n % _LANE != 0 or rows < pack:
        # Sizes that can't be reshaped to (rows, 128) for free (or are tiny):
        # a single fused XLA reduction is bandwidth-optimal and avoids the
        # padded-copy HBM traffic a Pallas path would need here.
        d = xf.astype(jnp.float32) - yf.astype(jnp.float32)
        return jnp.sqrt(jnp.sum(d * d) / jnp.float32(n))

    # ~2 MiB of each input per grid step by default (4096 rows f32, 8192 bf16).
    if block_rows is None:
        block_rows = (2 * 1024 * 1024) // (_LANE * itemsize)
    block_rows = max(pack, (min(block_rows, rows) // pack) * pack)

    total_blocks = -(-rows // block_rows)                       # ceil
    valid_last_rows = rows - (total_blocks - 1) * block_rows    # in [1, block_rows]

    ncores = min(_num_tensorcores(), total_blocks)
    steps = -(-total_blocks // ncores)                          # ceil

    # Size-preserving reshapes: metadata-only, no HBM copies.
    x2d = xf.reshape(rows, _LANE)
    y2d = yf.reshape(rows, _LANE)

    def in_index_map(c, i):
        # Clamp idle trailing steps to the last valid block; the kernel skips
        # their accumulation with the scalar `b < total_blocks` guard.
        return (jnp.minimum(c * steps + i, total_blocks - 1), 0)

    kernel = functools.partial(
        _rmse_partial_kernel,
        steps=steps, total_blocks=total_blocks,
        block_rows=block_rows, valid_last_rows=valid_last_rows)

    if ncores > 1:
        # Review suggestion: plain "parallel" may not shard across the two
        # v7x TensorCores; prefer CORE_PARALLEL (verify with a profile).
        dims = (getattr(pltpu, "CORE_PARALLEL", "parallel"), "arbitrary")
    else:
        dims = ("arbitrary", "arbitrary")

    partials = pl.pallas_call(
        kernel,
        out_shape=jax.ShapeDtypeStruct((ncores, 1), jnp.float32),
        grid_spec=pltpu.PrefetchScalarGridSpec(
            num_scalar_prefetch=0,
            grid=(ncores, steps),
            in_specs=[
                pl.BlockSpec((block_rows, _LANE), in_index_map),
                pl.BlockSpec((block_rows, _LANE), in_index_map),
            ],
            out_specs=pl.BlockSpec(
                (1, 1), lambda c, i: (c, 0),
                memory_space=pltpu.MemorySpace.SMEM),
            scratch_shapes=[pltpu.VMEM((_SUBLANE, _LANE), jnp.float32)],
        ),
        compiler_params=pltpu.CompilerParams(
            dimension_semantics=dims,
            vmem_limit_bytes=32 * 1024 * 1024,
        ),
        cost_estimate=pl.CostEstimate(
            flops=3 * n,
            transcendentals=0,
            bytes_accessed=int(x.nbytes + y.nbytes),
        ),
    )(x2d, y2d)

    # Combine per-core partial sums of squares; mean + sqrt in the wrapper.
    return jnp.sqrt(jnp.sum(partials) / jnp.float32(n))


if __name__ == "__main__":
    key = jax.random.PRNGKey(0)
    kx, ky = jax.random.split(key)
    # Small NCHW-shaped prediction / target, matching the module's usage.
    x = jax.random.normal(kx, (2, 4, 16, 16), dtype=jnp.float32)
    y = jax.random.normal(ky, (2, 4, 16, 16), dtype=jnp.float32)

    loss = jax.block_until_ready(rmse_loss(x, y))

    # Reference check against plain JAX (matches torch.sqrt(mse(x, y))).
    ref = jnp.sqrt(jnp.mean((x - y) ** 2))
    assert jnp.allclose(loss, ref, rtol=1e-5, atol=1e-6), (loss, ref)

    print("KERNEL_OK")
</pallas_src>

<mosaic_0001>
module attributes {stable_mosaic.version = 11 : i64} {
  func.func @_rmse_partial_kernel(%arg0: i32, %arg1: i32, %arg2: memref<16x128xf32, #tpu.memory_space<vmem>>, %arg3: memref<16x128xf32, #tpu.memory_space<vmem>>, %arg4: memref<1x1xf32, #tpu.memory_space<smem>>, %arg5: memref<8x128xf32, #tpu.memory_space<vmem>>) attributes {dimension_semantics = [#tpu.dimension_semantics<arbitrary>, #tpu.dimension_semantics<arbitrary>], iteration_bounds = array<i64: 1, 1>, scalar_prefetch = 0 : i64, scratch_operands = 1 : i64, tpu.core_type = #tpu.core_type<tc>, window_params = [{transform_indices = @transform_0, window_bounds = array<i64: 16, 128>}, {transform_indices = @transform_1, window_bounds = array<i64: 16, 128>}, {transform_indices = @transform_2, window_bounds = array<i64: 1, 1>}]} {
    %c1_i32 = arith.constant 1 : i32
    %0 = arith.muli %arg0, %c1_i32 : i32
    %1 = arith.addi %0, %arg1 : i32
    %c0_i32 = arith.constant 0 : i32
    %2 = arith.cmpi eq, %arg1, %c0_i32 : i32
    %3 = arith.extui %2 : i1 to i32
    %c0_i32_0 = arith.constant 0 : i32
    %4 = arith.cmpi ne, %3, %c0_i32_0 : i32
    scf.if %4 {
      %cst = arith.constant 0.000000e+00 : f32
      %11 = vector.broadcast %cst : f32 to vector<8x128xf32>
      %c0 = arith.constant 0 : index
      %c0_5 = arith.constant 0 : index
      %12 = vector.load %arg5[%c0, %c0_5] : memref<8x128xf32, #tpu.memory_space<vmem>>, vector<8x128xf32>
      tpu.vector_store %arg5[%c0, %c0_5], %11 {strides = array<i32>} : memref<8x128xf32, #tpu.memory_space<vmem>>, vector<8x128xf32>,
    } else {
    }
    %c1_i32_1 = arith.constant 1 : i32
    %5 = arith.cmpi slt, %1, %c1_i32_1 : i32
    %6 = arith.extui %5 : i1 to i32
    %c0_i32_2 = arith.constant 0 : i32
    %7 = arith.cmpi ne, %6, %c0_i32_2 : i32
    scf.if %7 {
      %c0 = arith.constant 0 : index
      %c0_5 = arith.constant 0 : index
      %11 = vector.load %arg2[%c0, %c0_5] : memref<16x128xf32, #tpu.memory_space<vmem>>, vector<16x128xf32>
      %c0_6 = arith.constant 0 : index
      %c0_7 = arith.constant 0 : index
      %12 = vector.load %arg3[%c0_6, %c0_7] : memref<16x128xf32, #tpu.memory_space<vmem>>, vector<16x128xf32>
      %13 = arith.subf %11, %12 : vector<16x128xf32>
      %14 = arith.mulf %13, %13 : vector<16x128xf32>
      %c0_8 = arith.constant 0 : index
      %c0_9 = arith.constant 0 : index
      %15 = vector.load %arg5[%c0_8, %c0_9] : memref<8x128xf32, #tpu.memory_space<vmem>>, vector<8x128xf32>
      %16 = vector.shape_cast %14 : vector<16x128xf32> to vector<2x8x128xf32>
      %cst = arith.constant dense<0.000000e+00> : vector<8x128xf32>
      %17 = vector.multi_reduction <add>, %16, %cst [0] : vector<2x8x128xf32> to vector<8x128xf32>
      %18 = arith.addf %15, %17 : vector<8x128xf32>
      %c0_10 = arith.constant 0 : index
      %c0_11 = arith.constant 0 : index
      %19 = vector.load %arg5[%c0_10, %c0_11] : memref<8x128xf32, #tpu.memory_space<vmem>>, vector<8x128xf32>
      tpu.vector_store %arg5[%c0_10, %c0_11], %18 {strides = array<i32>} : memref<8x128xf32, #tpu.memory_space<vmem>>, vector<8x128xf32>,
    } else {
    }
    %c0_i32_3 = arith.constant 0 : i32
    %8 = arith.cmpi eq, %arg1, %c0_i32_3 : i32
    %9 = arith.extui %8 : i1 to i32
    %c0_i32_4 = arith.constant 0 : i32
    %10 = arith.cmpi ne, %9, %c0_i32_4 : i32
    scf.if %10 {
      %c0 = arith.constant 0 : index
      %c0_5 = arith.constant 0 : index
      %11 = vector.load %arg5[%c0, %c0_5] : memref<8x128xf32, #tpu.memory_space<vmem>>, vector<8x128xf32>
      %12 = vector.shape_cast %11 : vector<8x128xf32> to vector<1x8x128xf32>
      %cst = arith.constant dense<0.000000e+00> : vector<1xf32>
      %13 = vector.multi_reduction <add>, %12, %cst [1, 2] : vector<1x8x128xf32> to vector<1xf32>
      %14 = vector.shape_cast %13 : vector<1xf32> to vector<1x1x1xf32>
      %15 = vector.extract %14[0, 0, 0] : f32 from vector<1x1x1xf32>
      %c0_6 = arith.constant 0 : index
      %c0_7 = arith.constant 0 : index
      %16 = memref.load %arg4[%c0_6, %c0_7] : memref<1x1xf32, #tpu.memory_space<smem>>
      memref.store %15, %arg4[%c0_6, %c0_7] : memref<1x1xf32, #tpu.memory_space<smem>>
    } else {
    }
    return
  }
  func.func @transform_0(%arg0: i32, %arg1: i32) -> (i32, i32) {
    %c1_i32 = arith.constant 1 : i32
    %0 = arith.muli %arg0, %c1_i32 : i32
    %1 = arith.addi %0, %arg1 : i32
    %c0_i32 = arith.constant 0 : i32
    %2 = arith.minsi %1, %c0_i32 : i32
    %c0_i32_0 = arith.constant 0 : i32
    %c0_i32_1 = arith.constant 0 : i32
    return %2, %c0_i32_0 : i32, i32
  }
  func.func @transform_1(%arg0: i32, %arg1: i32) -> (i32, i32) {
    %c1_i32 = arith.constant 1 : i32
    %0 = arith.muli %arg0, %c1_i32 : i32
    %1 = arith.addi %0, %arg1 : i32
    %c0_i32 = arith.constant 0 : i32
    %2 = arith.minsi %1, %c0_i32 : i32
    %c0_i32_0 = arith.constant 0 : i32
    %c0_i32_1 = arith.constant 0 : i32
    return %2, %c0_i32_0 : i32, i32
  }
  func.func @transform_2(%arg0: i32, %arg1: i32) -> (i32, i32) {
    %c0_i32 = arith.constant 0 : i32
    %c0_i32_0 = arith.constant 0 : i32
    return %arg0, %c0_i32 : i32, i32
  }
}

</mosaic_0001>

<llo_original>
// kernel: tpu_custom_call.1
$region0: #{tpu_custom_call.1}
  #allocation0 [shape = 'u32[]', space=smem, size = 0x4, offset = 0x4, fixed_abs, tag = 'smem constant byte address 0x4 - core index']
  #allocation1 [shape = 'u32[144,128]{1,0:T(1,128)}', space=vmem, size = 0x12000, scoped, tag = 'internal scratch']
  #allocation2 [shape = 'f32[8,128]{1,0:T(8,128)}', space=vmem, size = 0x1000, scoped, tag = 'scratch operand']
  %s0 = inlined_call_operand.hbm [shape: f32[16,128], index: 0, kind: input, shape index: {}]
  %s1 = inlined_call_operand.hbm [shape: f32[16,128], index: 1, kind: input, shape index: {}]
  %s2 = inlined_call_operand.hbm [shape: f32[1,1], index: 2, kind: output, shape index: {}]
  %s3 = sld [smem:[#allocation0]]
  $region38: #{tpu_custom_call.1} parent=0
    _
  %s5 = ssub.s32 1, %s3
  %s6 = scalar_select 0, %s5, %s3
  $region1: #{tpu_custom_call.1} parent=0
    #allocation3 [shape = 'u8[8192]{0}', space=vmem, size = 0x2000, scoped, tag = 'input window, operand 0, single buffered']
    #allocation4 [shape = 's32[1]{0}', space=sflag, size = 0x4, scoped, tag = 'scoped memory for tpu_custom_call.1']
    #allocation5 [shape = 's32[1]{0}', space=sflag, size = 0x4, scoped, tag = 'scoped memory for tpu_custom_call.1']
    #allocation6 [shape = 'u8[8192]{0}', space=vmem, size = 0x2000, scoped, tag = 'input window, operand 1, single buffered']
    #allocation7 [shape = 's32[1]{0}', space=sflag, size = 0x4, scoped, tag = 'scoped memory for tpu_custom_call.1']
    #allocation8 [shape = 'u8[512]{0}', space=smem, size = 0x200, scoped, tag = 'output window, operand 0, single buffered']
    %7 = vsyncpa [#allocation4], 0
    %8 = vsyncpa [#allocation7], 0
    %9 = vsyncpa [#allocation5], 0
    // Predicated region
    $region2: #{tpu_custom_call.1} parent=1 // pred_check
      _
    $region3: #{tpu_custom_call.1} parent=1 // pred_check_branch
      %11 = sbr.rel (0) target = $region5
    $region4: #{tpu_custom_call.1} parent=1 // pred_region
      %s12 = sadd.s32 0, 0
      %p13 = scmp.lt.s32.totalorder %s12, 0
      %s14 = scalar_select %p13, %s12, 0
      %s15 = smul.u32 2, %s14
      %s17 = ssub.s32 256, 256
      %18 = vsyncadd [#allocation4], %s17
      %s19 = smul.addr %s15, 128
      %s20 = scalar_lea.hbm %s0, %s19
      %s21 = sshll.u32 [#allocation3], 4
      %s22 = int_to_ptr.vmem [resolvable:$true] %s21
      %27 = dma.hbm_to_vmem [thread:$0]  %s20, 256, %s22, [#allocation4], 128, 128, 8
    $region5: #{tpu_custom_call.1} parent=1 // pred_fallthru
      _
    // Predicated region
    $region6: #{tpu_custom_call.1} parent=1 // pred_check
      _
    $region7: #{tpu_custom_call.1} parent=1 // pred_check_branch
      %29 = sbr.rel (0) target = $region9
    $region8: #{tpu_custom_call.1} parent=1 // pred_region
      %s30 = sadd.s32 0, 0
      %p31 = scmp.lt.s32.totalorder %s30, 0
      %s32 = scalar_select %p31, %s30, 0
      %s33 = smul.u32 2, %s32
      %s35 = ssub.s32 256, 256
      %36 = vsyncadd [#allocation7], %s35
      %s37 = smul.addr %s33, 128
      %s38 = scalar_lea.hbm %s1, %s37
      %s39 = sshll.u32 [#allocation6], 4
      %s40 = int_to_ptr.vmem [resolvable:$true] %s39
      %45 = dma.hbm_to_vmem [thread:$0]  %s38, 256, %s40, [#allocation7], 128, 128, 8
    $region9: #{tpu_custom_call.1} parent=1 // pred_fallthru
      _
    // Predicated region
    $region10: #{tpu_custom_call.1} parent=1 // pred_check
      _
    $region11: #{tpu_custom_call.1} parent=1 // pred_check_branch
      %47 = sbr.rel (0) target = $region13
    $region12: #{tpu_custom_call.1} parent=1 // pred_region
      %48 = dma.done [#allocation4], 256
    $region13: #{tpu_custom_call.1} parent=1 // pred_fallthru
      _
    // Predicated region
    $region14: #{tpu_custom_call.1} parent=1 // pred_check
      _
    $region15: #{tpu_custom_call.1} parent=1 // pred_check_branch
      %50 = sbr.rel (0) target = $region17
    $region16: #{tpu_custom_call.1} parent=1 // pred_region
      %51 = dma.done [#allocation7], 256
    $region17: #{tpu_custom_call.1} parent=1 // pred_fallthru
      _
    %s52 = sadd.s32 0, 0
    %p53 = scmp.lt.s32.totalorder %s52, 0
    %s54 = scalar_select %p53, %s52, 0
    %s55 = smul.u32 2, %s54
    %s56 = sadd.s32 0, 0
    %p57 = scmp.lt.s32.totalorder %s56, 0
    %s58 = scalar_select %p57, %s56, 0
    %s59 = smul.u32 2, %s58
    %s60 = sadd.s32 0, 0
    %p61 = scmp.eq.s32.totalorder 0, 0
    // Predicated region
    $region18: #{tpu_custom_call.1} parent=1 // pred_check
      %p62 = pneg %p61
    $region19: #{tpu_custom_call.1} parent=1 // pred_check_branch
      %64 = sbr.rel (%p62) target = $region21
    $region20: #{tpu_custom_call.1} parent=1 // pred_region
      %65 = vst [vmem:[#allocation2] sm:$0xff] 0.0
    $region21: #{tpu_custom_call.1} parent=1 // pred_fallthru
      _
    %p66 = scmp.lt.s32.totalorder %s60, 1
    // Predicated region
    $region22: #{tpu_custom_call.1} parent=1 // pred_check
      %p67 = pneg %p66
    $region23: #{tpu_custom_call.1} parent=1 // pred_check_branch
      %69 = sbr.rel (%p67) target = $region25
    $region24: #{tpu_custom_call.1} parent=1 // pred_region
      %v70 = vld [vmem:[#allocation3] sm:$0xff]
      %v71 = vld [vmem:[#allocation3 + $0x8] sm:$0xff]
      %v72 = vld [vmem:[#allocation6] sm:$0xff]
      %v73 = vld [vmem:[#allocation6 + $0x8] sm:$0xff]
      %v74 = vsub.f32 %v70, %v72
      %v75 = vsub.f32 %v71, %v73
      %v76 = vmul.f32 %v74, %v74
      %v77 = vmul.f32 %v75, %v75
      %v78 = vld [vmem:[#allocation2] sm:$0xff]
      %v79 = vadd.f32 %v76, %v77
      %v80 = vadd.f32 %v78, %v79
      %81 = vst [vmem:[#allocation2] sm:$0xff] %v80
    $region25: #{tpu_custom_call.1} parent=1 // pred_fallthru
      _
    // Predicated region
    $region26: #{tpu_custom_call.1} parent=1 // pred_check
      %p82 = pneg %p61
    $region27: #{tpu_custom_call.1} parent=1 // pred_check_branch
      %84 = sbr.rel (%p82) target = $region29
    $region28: #{tpu_custom_call.1} parent=1 // pred_region
      %v85 = vld [vmem:[#allocation2] sm:$0xff]
      %86 = vadd.xlane.f32.xlu0 %v85
      %v87 = vpop.xlane.xlu0 %86
      %v88 = vrot.slane %v87, 4
      %v89 = vadd.f32 %v87, %v88
      %v90 = vrot.slane %v89, 2
      %v91 = vadd.f32 %v89, %v90
      %v92 = vrot.slane %v91, 1
      %v93 = vadd.f32 %v91, %v92
      %s94 = vtos %v93
      %s95 = scalar_lea.smem [#allocation8], 0
      %96 = sst [smem:[%s95]] %s94
    $region29: #{tpu_custom_call.1} parent=1 // pred_fallthru
      _
    // Predicated region
    $region30: #{tpu_custom_call.1} parent=1 // pred_check
      _
    $region31: #{tpu_custom_call.1} parent=1 // pred_check_branch
      %98 = sbr.rel (0) target = $region33
    $region32: #{tpu_custom_call.1} parent=1 // pred_region
      %s100 = ssub.s32 16, 16
      %101 = vsyncadd [#allocation5], %s100
      %104 = dma.smem_to_hbm [#allocation8], 16, %s2, [#allocation5]
    $region33: #{tpu_custom_call.1} parent=1 // pred_fallthru
      _
    // Predicated region
    $region34: #{tpu_custom_call.1} parent=1 // pred_check
      _
    $region35: #{tpu_custom_call.1} parent=1 // pred_check_branch
      %106 = sbr.rel (0) target = $region37
    $region36: #{tpu_custom_call.1} parent=1 // pred_region
      %107 = dma.done [#allocation5], 16
    $region37: #{tpu_custom_call.1} parent=1 // pred_fallthru
      _
    %108 = sfence
    %109 = vsyncpa [#allocation4], 1
    %110 = vsyncpa [#allocation7], 1
    %111 = vsyncpa [#allocation5], 1

</llo_original>
